<compile_context>
chip_gen: v7x
topology: tpu7x:2x2x1
jax: 0.10.0
libtpu: 0.0.40
codegen_flags: <defaults>
</compile_context>

<pallas_src>
import jax
import jax.numpy as jnp
from jax.experimental import pallas as pl
from jax.experimental.pallas import tpu as pltpu


# ----------------------------- Pallas kernel -------------------------------

def _inv1x1_kernel(z_ref, w_ref, o_ref):
    # z_ref: (bb, C, lt)   w_ref: (C, C) f32   o_ref: (bb, C, lt)
    w = w_ref[...]
    for b in range(z_ref.shape[0]):          # static, tiny (1..B) -> unrolled
        o_ref[b] = jnp.dot(
            w, z_ref[b], preferred_element_type=jnp.float32
        ).astype(o_ref.dtype)


# ----------------------------- tiling helpers -------------------------------

_TARGET_BLOCK_BYTES = 2 * 1024 * 1024   # aim for ~2 MiB per streamed block
_VMEM_BLOCK_BUDGET = 24 * 1024 * 1024   # 2-in + 2-out double buffers must fit
                                        # here (leaves headroom on v7x 64 MiB)


def _round_down_128(x):
    return (x // 128) * 128


def _round_up_128(x):
    return ((x + 127) // 128) * 128


def _pick_lane_tile(L, row_bytes, l_tile=None):
    """Pick the lane tile. row_bytes = bytes per unit of L in one block."""
    if L < 128:
        return L  # full-extent last dim is always a legal block shape
    # Largest lt whose double-buffered in+out blocks fit the VMEM budget.
    lt_max = max(128, 128 * (_VMEM_BLOCK_BUDGET // (4 * row_bytes * 128)))
    if l_tile is None:
        lt = _round_up_128(max(1, _TARGET_BLOCK_BYTES // row_bytes))
    else:
        lt = max(128, _round_down_128(l_tile))
    lt = min(lt, lt_max, _round_down_128(L))
    return max(lt, 128)


# ------------------------------ public wrapper ------------------------------

def invertible_1x1_conv(z, W, reverse=False, *, l_tile=None):
    """Forward pass of Invertible1x1Conv.

    z: (B, C, L) activations (group_size = C, n_of_groups = L)
    W: (C, C) weight (the Conv1d kernel with the trailing size-1 dim squeezed)

    reverse=False -> (conv1d(z, W), log_det_W)
    reverse=True  -> conv1d(z, W^-1)
    """
    B, C, L = z.shape
    itemsize = jnp.dtype(z.dtype).itemsize

    W32 = W.astype(jnp.float32)
    if reverse:
        # TODO(synk): matrix inverse has no Pallas primitive; computed once in
        # plain JAX on the tiny (C, C) matrix and kept in float32 inside the
        # kernel (mirrors the module's W_inverse caching, without precision loss).
        W_use = jnp.linalg.inv(W32)
    else:
        W_use = W32

    # Fold the whole batch into one block when its double-buffered working set
    # is trivially small (always true for WaveGlow-sized B); otherwise keep a
    # per-batch grid axis.
    fold_batch = 4 * B * C * itemsize * 128 <= _VMEM_BLOCK_BUDGET
    bb = B if fold_batch else 1
    row_bytes = bb * C * itemsize

    lt = _pick_lane_tile(L, row_bytes, l_tile)
    l_tiles = pl.cdiv(L, lt)

    if fold_batch:
        grid = (l_tiles,)
        z_spec = pl.BlockSpec((bb, C, lt), lambda l: (0, 0, l))
        w_spec = pl.BlockSpec((C, C), lambda l: (0, 0))
        o_spec = pl.BlockSpec((bb, C, lt), lambda l: (0, 0, l))
        dims = ("parallel",)
    else:
        grid = (B, l_tiles)
        z_spec = pl.BlockSpec((1, C, lt), lambda b, l: (b, 0, l))
        w_spec = pl.BlockSpec((C, C), lambda b, l: (0, 0))
        o_spec = pl.BlockSpec((1, C, lt), lambda b, l: (b, 0, l))
        dims = ("parallel", "parallel")

    cost = pl.CostEstimate(
        flops=2 * B * C * C * L,
        transcendentals=0,
        bytes_accessed=2 * B * C * L * itemsize + C * C * 4,
    )

    out = pl.pallas_call(
        _inv1x1_kernel,
        out_shape=jax.ShapeDtypeStruct((B, C, L), z.dtype),
        grid=grid,
        in_specs=[z_spec, w_spec],
        out_specs=o_spec,
        compiler_params=pltpu.CompilerParams(
            dimension_semantics=dims,
            vmem_limit_bytes=48 * 1024 * 1024,  # fits v7x (64 MiB) and v5e/v6e
        ),
        cost_estimate=cost,
    )(z, W_use)

    if reverse:
        return out

    # TODO(synk): determinant has no Pallas primitive; computed once in plain
    # JAX.  Matches the reference: batch_size * n_of_groups * det(W).abs().log()
    log_det_W = (B * L) * jnp.log(jnp.abs(jnp.linalg.det(W32)))
    return out, log_det_W


# ----------------------------- param init ----------------------------------

def init_invertible_1x1_weight(key, c):
    """Same init as the PyTorch module: QR of a normal matrix, det forced > 0."""
    A = jax.random.normal(key, (c, c), dtype=jnp.float32)
    Q, _ = jnp.linalg.qr(A)
    Q = jnp.where(jnp.linalg.det(Q) < 0, Q.at[:, 0].multiply(-1.0), Q)
    return Q


# --------------------------------- main -------------------------------------

if __name__ == "__main__":
    key = jax.random.PRNGKey(0)
    kw, kz, kw2, kz2 = jax.random.split(key, 4)

    # WaveGlow-like shapes: batch=2, group_size=8, n_of_groups=2048 (lane-aligned).
    B, C, L = 2, 8, 2048
    W = init_invertible_1x1_weight(kw, C)
    z = jax.random.normal(kz, (B, C, L), dtype=jnp.float32)

    out, log_det_W = invertible_1x1_conv(z, W)
    out, log_det_W = jax.block_until_ready((out, log_det_W))
    assert out.shape == (B, C, L)

    # Reference check (loose tolerance covers MXU precision-mode differences
    # between the XLA reference dot and the Pallas matmul).
    ref = jnp.einsum("oi,bil->bol", W, z)
    ref_ld = B * L * jnp.log(jnp.abs(jnp.linalg.det(W)))
    assert jnp.allclose(out, ref, atol=5e-2, rtol=5e-2)
    assert jnp.allclose(log_det_W, ref_ld, atol=1e-3, rtol=1e-3)

    # Ragged (non-128-aligned) L and odd C exercise the masked partial last
    # block, plus the reverse path round-trips back to the input.
    B2, C2, L2 = 2, 6, 200
    W2 = init_invertible_1x1_weight(kw2, C2)
    z2 = jax.random.normal(kz2, (B2, C2, L2), dtype=jnp.float32)
    fwd2, _ = invertible_1x1_conv(z2, W2)
    ref2 = jnp.einsum("oi,bil->bol", W2, z2)
    assert jnp.allclose(fwd2, ref2, atol=5e-2, rtol=5e-2)
    back2 = invertible_1x1_conv(fwd2, W2, reverse=True)
    back2 = jax.block_until_ready(back2)
    assert jnp.allclose(back2, z2, atol=5e-2, rtol=5e-2)

    # Explicit user tile override (non-128-multiple) gets rounded legally.
    out3, _ = invertible_1x1_conv(z, W, l_tile=1000)
    out3 = jax.block_until_ready(out3)
    assert jnp.allclose(out3, ref, atol=5e-2, rtol=5e-2)

    print("KERNEL_OK")
</pallas_src>

<mosaic_0001>
module attributes {stable_mosaic.version = 11 : i64} {
  func.func @_inv1x1_kernel(%arg0: i32, %arg1: memref<2x8x2048xf32, #tpu.memory_space<vmem>>, %arg2: memref<8x8xf32, #tpu.memory_space<vmem>>, %arg3: memref<2x8x2048xf32, #tpu.memory_space<vmem>>) attributes {dimension_semantics = [#tpu.dimension_semantics<parallel>], iteration_bounds = array<i64: 1>, scalar_prefetch = 0 : i64, scratch_operands = 0 : i64, tpu.core_type = #tpu.core_type<tc>, window_params = [{transform_indices = @transform_0, window_bounds = array<i64: 2, 8, 2048>}, {pipeline_mode = #tpu.pipeline_mode<synchronous>, transform_indices = @transform_1, window_bounds = array<i64: 8, 8>}, {transform_indices = @transform_2, window_bounds = array<i64: 2, 8, 2048>}]} {
    %c0 = arith.constant 0 : index
    %c0_0 = arith.constant 0 : index
    %0 = vector.load %arg2[%c0, %c0_0] : memref<8x8xf32, #tpu.memory_space<vmem>>, vector<8x8xf32>
    %c0_1 = arith.constant 0 : index
    %c0_2 = arith.constant 0 : index
    %c0_3 = arith.constant 0 : index
    %1 = vector.load %arg1[%c0_1, %c0_2, %c0_3] : memref<2x8x2048xf32, #tpu.memory_space<vmem>>, vector<1x8x2048xf32>
    %2 = vector.shape_cast %1 : vector<1x8x2048xf32> to vector<8x2048xf32>
    %cst = arith.constant dense<0.000000e+00> : vector<8x2048xf32>
    %3 = tpu.matmul %0, %2, %cst {dimension_numbers = #tpu.dot_dimension_numbers<[1], [0], [0], [1], [0, 0, 1, 1], [], []>} : vector<8x8xf32>, vector<8x2048xf32>, vector<8x2048xf32> -> vector<8x2048xf32>
    %c0_4 = arith.constant 0 : index
    %c0_5 = arith.constant 0 : index
    %c0_6 = arith.constant 0 : index
    %4 = vector.load %arg3[%c0_4, %c0_5, %c0_6] : memref<2x8x2048xf32, #tpu.memory_space<vmem>>, vector<1x8x2048xf32>
    %5 = vector.shape_cast %4 : vector<1x8x2048xf32> to vector<8x2048xf32>
    %6 = vector.shape_cast %3 : vector<8x2048xf32> to vector<1x8x2048xf32>
    tpu.vector_store %arg3[%c0_4, %c0_5, %c0_6], %6 {strides = array<i32>} : memref<2x8x2048xf32, #tpu.memory_space<vmem>>, vector<1x8x2048xf32>,
    %c1 = arith.constant 1 : index
    %c0_7 = arith.constant 0 : index
    %c0_8 = arith.constant 0 : index
    %7 = vector.load %arg1[%c1, %c0_7, %c0_8] : memref<2x8x2048xf32, #tpu.memory_space<vmem>>, vector<1x8x2048xf32>
    %8 = vector.shape_cast %7 : vector<1x8x2048xf32> to vector<8x2048xf32>
    %cst_9 = arith.constant dense<0.000000e+00> : vector<8x2048xf32>
    %9 = tpu.matmul %0, %8, %cst_9 {dimension_numbers = #tpu.dot_dimension_numbers<[1], [0], [0], [1], [0, 0, 1, 1], [], []>} : vector<8x8xf32>, vector<8x2048xf32>, vector<8x2048xf32> -> vector<8x2048xf32>
    %c1_10 = arith.constant 1 : index
    %c0_11 = arith.constant 0 : index
    %c0_12 = arith.constant 0 : index
    %10 = vector.load %arg3[%c1_10, %c0_11, %c0_12] : memref<2x8x2048xf32, #tpu.memory_space<vmem>>, vector<1x8x2048xf32>
    %11 = vector.shape_cast %10 : vector<1x8x2048xf32> to vector<8x2048xf32>
    %12 = vector.shape_cast %9 : vector<8x2048xf32> to vector<1x8x2048xf32>
    tpu.vector_store %arg3[%c1_10, %c0_11, %c0_12], %12 {strides = array<i32>} : memref<2x8x2048xf32, #tpu.memory_space<vmem>>, vector<1x8x2048xf32>,
    return
  }
  func.func @transform_0(%arg0: i32) -> (i32, i32, i32) {
    %c0_i32 = arith.constant 0 : i32
    %c0_i32_0 = arith.constant 0 : i32
    %c0_i32_1 = arith.constant 0 : i32
    return %c0_i32, %c0_i32_0, %arg0 : i32, i32, i32
  }
  func.func @transform_1(%arg0: i32) -> (i32, i32) {
    %c0_i32 = arith.constant 0 : i32
    %c0_i32_0 = arith.constant 0 : i32
    %c0_i32_1 = arith.constant 0 : i32
    return %c0_i32, %c0_i32_0 : i32, i32
  }
  func.func @transform_2(%arg0: i32) -> (i32, i32, i32) {
    %c0_i32 = arith.constant 0 : i32
    %c0_i32_0 = arith.constant 0 : i32
    %c0_i32_1 = arith.constant 0 : i32
    return %c0_i32, %c0_i32_0, %arg0 : i32, i32, i32
  }
}

</mosaic_0001>

<llo_original>
// kernel: tpu_custom_call.1
$region0: #{tpu_custom_call.1}
  #allocation0 [shape = 'u32[]', space=smem, size = 0x4, offset = 0x4, fixed_abs, tag = 'smem constant byte address 0x4 - core index']
  #allocation1 [shape = 'u32[144,128]{1,0:T(1,128)}', space=vmem, size = 0x12000, scoped, tag = 'internal scratch']
  %s0 = inlined_call_operand.hbm [shape: f32[2,8,2048], index: 0, kind: input, shape index: {}]
  %s1 = inlined_call_operand.hbm [shape: f32[8,8], index: 1, kind: input, shape index: {}]
  %s2 = inlined_call_operand.hbm [shape: f32[2,8,2048], index: 2, kind: output, shape index: {}]
  %s3 = sld [smem:[#allocation0]]
  $region26: #{tpu_custom_call.1} parent=0
    _
  %s5 = ssub.s32 1, %s3
  %s6 = scalar_select 0, %s5, %s3
  $region1: #{tpu_custom_call.1} parent=0
    #allocation2 [shape = 'u8[131072]{0}', space=vmem, size = 0x20000, scoped, tag = 'input window, operand 0, single buffered']
    #allocation3 [shape = 's32[1]{0}', space=sflag, size = 0x4, scoped, tag = 'scoped memory for tpu_custom_call.1']
    #allocation4 [shape = 's32[1]{0}', space=sflag, size = 0x4, scoped, tag = 'scoped memory for tpu_custom_call.1']
    #allocation5 [shape = 'u8[4096]{0}', space=vmem, size = 0x1000, scoped, tag = 'input window, operand 1, single buffered']
    #allocation6 [shape = 's32[1]{0}', space=sflag, size = 0x4, scoped, tag = 'scoped memory for tpu_custom_call.1']
    #allocation7 [shape = 'u8[131072]{0}', space=vmem, size = 0x20000, scoped, tag = 'output window, operand 0, single buffered']
    %7 = vsyncpa [#allocation3], 0
    %8 = vsyncpa [#allocation6], 0
    %9 = vsyncpa [#allocation4], 0
    // Predicated region
    $region2: #{tpu_custom_call.1} parent=1 // pred_check
      _
    $region3: #{tpu_custom_call.1} parent=1 // pred_check_branch
      %11 = sbr.rel (0) target = $region5
    $region4: #{tpu_custom_call.1} parent=1 // pred_region
      %s13 = ssub.s32 4096, 4096
      %14 = vsyncadd [#allocation3], %s13
      %s15 = sshll.u32 [#allocation2], 4
      %s16 = int_to_ptr.vmem [resolvable:$true] %s15
      %21 = dma.hbm_to_vmem [thread:$0]  %s0, 4096, %s16, [#allocation3], 2048, 2048, 128
    $region5: #{tpu_custom_call.1} parent=1 // pred_fallthru
      _
    // Predicated region
    $region6: #{tpu_custom_call.1} parent=1 // pred_check
      _
    $region7: #{tpu_custom_call.1} parent=1 // pred_check_branch
      %23 = sbr.rel (0) target = $region9
    $region8: #{tpu_custom_call.1} parent=1 // pred_region
      %s25 = ssub.s32 128, 128
      %26 = vsyncadd [#allocation6], %s25
      %s28 = sshll.u32 [#allocation5], 4
      %s29 = int_to_ptr.vmem [resolvable:$true] %s28
      %31 = dma.hbm_to_vmem [thread:$0]  %s1, 128, %s29, [#allocation6]
    $region9: #{tpu_custom_call.1} parent=1 // pred_fallthru
      _
    // Predicated region
    $region10: #{tpu_custom_call.1} parent=1 // pred_check
      _
    $region11: #{tpu_custom_call.1} parent=1 // pred_check_branch
      %33 = sbr.rel (0) target = $region13
    $region12: #{tpu_custom_call.1} parent=1 // pred_region
      %34 = dma.done [#allocation3], 4096
    $region13: #{tpu_custom_call.1} parent=1 // pred_fallthru
      _
    // Predicated region
    $region14: #{tpu_custom_call.1} parent=1 // pred_check
      _
    $region15: #{tpu_custom_call.1} parent=1 // pred_check_branch
      %36 = sbr.rel (0) target = $region17
    $region16: #{tpu_custom_call.1} parent=1 // pred_region
      %37 = dma.done [#allocation6], 128
    $region17: #{tpu_custom_call.1} parent=1 // pred_fallthru
      _
    %v38 = vld [vmem:[#allocation5] sm:$0xff]
    %v39 = vld [vmem:[#allocation2] sm:$0xff]
    %v40 = vld [vmem:[#allocation2 + $0x8] sm:$0xff]
    %v41 = vld [vmem:[#allocation2 + $0x10] sm:$0xff]
    %v42 = vld [vmem:[#allocation2 + $0x18] sm:$0xff]
    %v43 = vld [vmem:[#allocation2 + $0x20] sm:$0xff]
    %v44 = vld [vmem:[#allocation2 + $0x28] sm:$0xff]
    %v45 = vld [vmem:[#allocation2 + $0x30] sm:$0xff]
    %v46 = vld [vmem:[#allocation2 + $0x38] sm:$0xff]
    %v47 = vld [vmem:[#allocation2 + $0x40] sm:$0xff]
    %v48 = vld [vmem:[#allocation2 + $0x48] sm:$0xff]
    %v49 = vld [vmem:[#allocation2 + $0x50] sm:$0xff]
    %v50 = vld [vmem:[#allocation2 + $0x58] sm:$0xff]
    %v51 = vld [vmem:[#allocation2 + $0x60] sm:$0xff]
    %v52 = vld [vmem:[#allocation2 + $0x68] sm:$0xff]
    %v53 = vld [vmem:[#allocation2 + $0x70] sm:$0xff]
    %v54 = vld [vmem:[#allocation2 + $0x78] sm:$0xff]
    %vm55 = vcmask 64512
    %v57 = vsel %vm55, %v38, 0
    %59 = vmatprep.subr.mxu0 %v40
    %60 = vmatpush1.msra.mxu0 %v39
    %61 = vmatprep.subr.mxu0 0.0
    %62 = vmatpush1.msra.mxu0 0.0
    %63 = vmatprep.subr.mxu0 0.0
    %64 = vmatpush1.msra.mxu0 0.0
    %65 = vmatprep.subr.mxu0 0.0
    %66 = vmatpush1.msra.mxu0 0.0
    %67 = vmatprep.subr.mxu0 0.0
    %68 = vmatpush1.msra.mxu0 0.0
    %69 = vmatprep.subr.mxu0 0.0
    %70 = vmatpush1.msra.mxu0 0.0
    %71 = vmatprep.subr.mxu0 0.0
    %72 = vmatpush1.msra.mxu0 0.0
    %73 = vmatprep.subr.mxu0 0.0
    %74 = vmatpush1.msra.mxu0 0.0
    %75 = vmatprep.subr.mxu0 0.0
    %76 = vmatpush1.msra.mxu0 0.0
    %77 = vmatprep.subr.mxu0 0.0
    %78 = vmatpush1.msra.mxu0 0.0
    %79 = vmatprep.subr.mxu0 0.0
    %80 = vmatpush1.msra.mxu0 0.0
    %81 = vmatprep.subr.mxu0 0.0
    %82 = vmatpush1.msra.mxu0 0.0
    %83 = vmatprep.subr.mxu0 0.0
    %84 = vmatpush1.msra.mxu0 0.0
    %85 = vmatprep.subr.mxu0 0.0
    %86 = vmatpush1.msra.mxu0 0.0
    %87 = vmatprep.subr.mxu0 0.0
    %88 = vmatpush1.msra.mxu0 0.0
    %89 = vmatprep.subr.mxu0 0.0
    %90 = vmatpush1.msra.mxu0 0.0
    %91 = vmatprep.subr.mxu0 0.0
    %92 = vmatpush1.msra.mxu0 0.0
    %93 = vmatprep.subr.mxu0 0.0
    %94 = vmatpush1.msra.mxu0 0.0
    %95 = vmatprep.subr.mxu0 0.0
    %96 = vmatpush1.msra.mxu0 0.0
    %97 = vmatprep.subr.mxu0 0.0
    %98 = vmatpush1.msra.mxu0 0.0
    %99 = vmatprep.subr.mxu0 0.0
    %100 = vmatpush1.msra.mxu0 0.0
    %101 = vmatprep.subr.mxu0 0.0
    %102 = vmatpush1.msra.mxu0 0.0
    %103 = vmatprep.subr.mxu0 0.0
    %104 = vmatpush1.msra.mxu0 0.0
    %105 = vmatprep.subr.mxu0 0.0
    %106 = vmatpush1.msra.mxu0 0.0
    %107 = vmatprep.subr.mxu0 0.0
    %108 = vmatpush1.msra.mxu0 0.0
    %109 = vmatprep.subr.mxu0 0.0
    %110 = vmatpush1.msra.mxu0 0.0
    %111 = vmatprep.subr.mxu0 0.0
    %112 = vmatpush1.msra.mxu0 0.0
    %113 = vmatprep.subr.mxu0 0.0
    %114 = vmatpush1.msra.mxu0 0.0
    %115 = vmatprep.subr.mxu0 0.0
    %116 = vmatpush1.msra.mxu0 0.0
    %117 = vmatprep.subr.mxu0 0.0
    %118 = vmatpush1.msra.mxu0 0.0
    %119 = vmatprep.subr.mxu0 0.0
    %120 = vmatpush1.msra.mxu0 0.0
    %121 = vmatprep.subr.mxu0 0.0
    %122 = vmatpush1.msra.mxu0 0.0
    %123 = vmatprep.mubr.f32.mxu0 0.0
    %124 = vmatmul.mubr.f32.gmra.mrb[0].mxu0 %v57
    %v125 = vpop.f32.mrb[0].mxu0
    %v126 = vadd.f32 0.0, %v125
    %v127 = vpop.f32.mrb[0].mxu0
    %v128 = vadd.f32 0.0, %v127
    %129 = vdwg.mxu0
    %130 = vmatprep.subr.mxu0 %v42
    %131 = vmatpush1.msra.mxu0 %v41
    %132 = vmatprep.subr.mxu0 0.0
    %133 = vmatpush1.msra.mxu0 0.0
    %134 = vmatprep.subr.mxu0 0.0
    %135 = vmatpush1.msra.mxu0 0.0
    %136 = vmatprep.subr.mxu0 0.0
    %137 = vmatpush1.msra.mxu0 0.0
    %138 = vmatprep.subr.mxu0 0.0
    %139 = vmatpush1.msra.mxu0 0.0
    %140 = vmatprep.subr.mxu0 0.0
    %141 = vmatpush1.msra.mxu0 0.0
    %142 = vmatprep.subr.mxu0 0.0
    %143 = vmatpush1.msra.mxu0 0.0
    %144 = vmatprep.subr.mxu0 0.0
    %145 = vmatpush1.msra.mxu0 0.0
    %146 = vmatprep.subr.mxu0 0.0
    %147 = vmatpush1.msra.mxu0 0.0
    %148 = vmatprep.subr.mxu0 0.0
    %149 = vmatpush1.msra.mxu0 0.0
    %150 = vmatprep.subr.mxu0 0.0
    %151 = vmatpush1.msra.mxu0 0.0
    %152 = vmatprep.subr.mxu0 0.0
    %153 = vmatpush1.msra.mxu0 0.0
    %154 = vmatprep.subr.mxu0 0.0
    %155 = vmatpush1.msra.mxu0 0.0
    %156 = vmatprep.subr.mxu0 0.0
    %157 = vmatpush1.msra.mxu0 0.0
    %158 = vmatprep.subr.mxu0 0.0
    %159 = vmatpush1.msra.mxu0 0.0
    %160 = vmatprep.subr.mxu0 0.0
    %161 = vmatpush1.msra.mxu0 0.0
    %162 = vmatprep.subr.mxu0 0.0
    %163 = vmatpush1.msra.mxu0 0.0
    %164 = vmatprep.subr.mxu0 0.0
    %165 = vmatpush1.msra.mxu0 0.0
    %166 = vmatprep.subr.mxu0 0.0
    %167 = vmatpush1.msra.mxu0 0.0
    %168 = vmatprep.subr.mxu0 0.0
    %169 = vmatpush1.msra.mxu0 0.0
    %170 = vmatprep.subr.mxu0 0.0
    %171 = vmatpush1.msra.mxu0 0.0
    %172 = vmatprep.subr.mxu0 0.0
    %173 = vmatpush1.msra.mxu0 0.0
    %174 = vmatprep.subr.mxu0 0.0
    %175 = vmatpush1.msra.mxu0 0.0
    %176 = vmatprep.subr.mxu0 0.0
    %177 = vmatpush1.msra.mxu0 0.0
    %178 = vmatprep.subr.mxu0 0.0
    %179 = vmatpush1.msra.mxu0 0.0
    %180 = vmatprep.subr.mxu0 0.0
    %181 = vmatpush1.msra.mxu0 0.0
    %182 = vmatprep.subr.mxu0 0.0
    %183 = vmatpush1.msra.mxu0 0.0
    %184 = vmatprep.subr.mxu0 0.0
    %185 = vmatpush1.msra.mxu0 0.0
    %186 = vmatprep.subr.mxu0 0.0
    %187 = vmatpush1.msra.mxu0 0.0
    %188 = vmatprep.subr.mxu0 0.0
    %189 = vmatpush1.msra.mxu0 0.0
    %190 = vmatprep.subr.mxu0 0.0
    %191 = vmatpush1.msra.mxu0 0.0
    %192 = vmatprep.subr.mxu0 0.0
    %193 = vmatpush1.msra.mxu0 0.0
    %194 = vmatprep.mubr.f32.mxu0 0.0
    %195 = vmatmul.mubr.f32.gmra.mrb[0].mxu0 %v57
    %v196 = vpop.f32.mrb[0].mxu0
    %v197 = vadd.f32 0.0, %v196
    %v198 = vpop.f32.mrb[0].mxu0
    %v199 = vadd.f32 0.0, %v198
    %200 = vdwg.mxu0
    %201 = vmatprep.subr.mxu0 %v44
    %202 = vmatpush1.msra.mxu0 %v43
    %203 = vmatprep.subr.mxu0 0.0
    %204 = vmatpush1.msra.mxu0 0.0
    %205 = vmatprep.subr.mxu0 0.0
    %206 = vmatpush1.msra.mxu0 0.0
    %207 = vmatprep.subr.mxu0 0.0
    %208 = vmatpush1.msra.mxu0 0.0
    %209 = vmatprep.subr.mxu0 0.0
    %210 = vmatpush1.msra.mxu0 0.0
    %211 = vmatprep.subr.mxu0 0.0
    %212 = vmatpush1.msra.mxu0 0.0
    %213 = vmatprep.subr.mxu0 0.0
    %214 = vmatpush1.msra.mxu0 0.0
    %215 = vmatprep.subr.mxu0 0.0
    %216 = vmatpush1.msra.mxu0 0.0
    %217 = vmatprep.subr.mxu0 0.0
    %218 = vmatpush1.msra.mxu0 0.0
    %219 = vmatprep.subr.mxu0 0.0
    %220 = vmatpush1.msra.mxu0 0.0
    %221 = vmatprep.subr.mxu0 0.0
    %222 = vmatpush1.msra.mxu0 0.0
    %223 = vmatprep.subr.mxu0 0.0
    %224 = vmatpush1.msra.mxu0 0.0
    %225 = vmatprep.subr.mxu0 0.0
    %226 = vmatpush1.msra.mxu0 0.0
    %227 = vmatprep.subr.mxu0 0.0
    %228 = vmatpush1.msra.mxu0 0.0
    %229 = vmatprep.subr.mxu0 0.0
    %230 = vmatpush1.msra.mxu0 0.0
    %231 = vmatprep.subr.mxu0 0.0
    %232 = vmatpush1.msra.mxu0 0.0
    %233 = vmatprep.subr.mxu0 0.0
    %234 = vmatpush1.msra.mxu0 0.0
    %235 = vmatprep.subr.mxu0 0.0
    %236 = vmatpush1.msra.mxu0 0.0
    %237 = vmatprep.subr.mxu0 0.0
    %238 = vmatpush1.msra.mxu0 0.0
    %239 = vmatprep.subr.mxu0 0.0
    %240 = vmatpush1.msra.mxu0 0.0
    %241 = vmatprep.subr.mxu0 0.0
    %242 = vmatpush1.msra.mxu0 0.0
    %243 = vmatprep.subr.mxu0 0.0
    %244 = vmatpush1.msra.mxu0 0.0
    %245 = vmatprep.subr.mxu0 0.0
    %246 = vmatpush1.msra.mxu0 0.0
    %247 = vmatprep.subr.mxu0 0.0
    %248 = vmatpush1.msra.mxu0 0.0
    %249 = vmatprep.subr.mxu0 0.0
    %250 = vmatpush1.msra.mxu0 0.0
    %251 = vmatprep.subr.mxu0 0.0
    %252 = vmatpush1.msra.mxu0 0.0
    %253 = vmatprep.subr.mxu0 0.0
    %254 = vmatpush1.msra.mxu0 0.0
    %255 = vmatprep.subr.mxu0 0.0
    %256 = vmatpush1.msra.mxu0 0.0
    %257 = vmatprep.subr.mxu0 0.0
    %258 = vmatpush1.msra.mxu0 0.0
    %259 = vmatprep.subr.mxu0 0.0
    %260 = vmatpush1.msra.mxu0 0.0
    %261 = vmatprep.subr.mxu0 0.0
    %262 = vmatpush1.msra.mxu0 0.0
    %263 = vmatprep.subr.mxu0 0.0
    %264 = vmatpush1.msra.mxu0 0.0
    %265 = vmatprep.mubr.f32.mxu0 0.0
    %266 = vmatmul.mubr.f32.gmra.mrb[0].mxu0 %v57
    %v267 = vpop.f32.mrb[0].mxu0
    %v268 = vadd.f32 0.0, %v267
    %v269 = vpop.f32.mrb[0].mxu0
    %v270 = vadd.f32 0.0, %v269
    %271 = vdwg.mxu0
    %272 = vmatprep.subr.mxu0 %v46
    %273 = vmatpush1.msra.mxu0 %v45
    %274 = vmatprep.subr.mxu0 0.0
    %275 = vmatpush1.msra.mxu0 0.0
    %276 = vmatprep.subr.mxu0 0.0
    %277 = vmatpush1.msra.mxu0 0.0
    %278 = vmatprep.subr.mxu0 0.0
    %279 = vmatpush1.msra.mxu0 0.0
    %280 = vmatprep.subr.mxu0 0.0
    %281 = vmatpush1.msra.mxu0 0.0
    %282 = vmatprep.subr.mxu0 0.0
    %283 = vmatpush1.msra.mxu0 0.0
    %284 = vmatprep.subr.mxu0 0.0
    %285 = vmatpush1.msra.mxu0 0.0
    %286 = vmatprep.subr.mxu0 0.0
    %287 = vmatpush1.msra.mxu0 0.0
    %288 = vmatprep.subr.mxu0 0.0
    %289 = vmatpush1.msra.mxu0 0.0
    %290 = vmatprep.subr.mxu0 0.0
    %291 = vmatpush1.msra.mxu0 0.0
    %292 = vmatprep.subr.mxu0 0.0
    %293 = vmatpush1.msra.mxu0 0.0
    %294 = vmatprep.subr.mxu0 0.0
    %295 = vmatpush1.msra.mxu0 0.0
    %296 = vmatprep.subr.mxu0 0.0
    %297 = vmatpush1.msra.mxu0 0.0
    %298 = vmatprep.subr.mxu0 0.0
    %299 = vmatpush1.msra.mxu0 0.0
    %300 = vmatprep.subr.mxu0 0.0
    %301 = vmatpush1.msra.mxu0 0.0
    %302 = vmatprep.subr.mxu0 0.0
    %303 = vmatpush1.msra.mxu0 0.0
    %304 = vmatprep.subr.mxu0 0.0
    %305 = vmatpush1.msra.mxu0 0.0
    %306 = vmatprep.subr.mxu0 0.0
    %307 = vmatpush1.msra.mxu0 0.0
    %308 = vmatprep.subr.mxu0 0.0
    %309 = vmatpush1.msra.mxu0 0.0
    %310 = vmatprep.subr.mxu0 0.0
    %311 = vmatpush1.msra.mxu0 0.0
    %312 = vmatprep.subr.mxu0 0.0
    %313 = vmatpush1.msra.mxu0 0.0
    %314 = vmatprep.subr.mxu0 0.0
    %315 = vmatpush1.msra.mxu0 0.0
    %316 = vmatprep.subr.mxu0 0.0
    %317 = vmatpush1.msra.mxu0 0.0
    %318 = vmatprep.subr.mxu0 0.0
    %319 = vmatpush1.msra.mxu0 0.0
    %320 = vmatprep.subr.mxu0 0.0
    %321 = vmatpush1.msra.mxu0 0.0
    %322 = vmatprep.subr.mxu0 0.0
    %323 = vmatpush1.msra.mxu0 0.0
    %324 = vmatprep.subr.mxu0 0.0
    %325 = vmatpush1.msra.mxu0 0.0
    %326 = vmatprep.subr.mxu0 0.0
    %327 = vmatpush1.msra.mxu0 0.0
    %328 = vmatprep.subr.mxu0 0.0
    %329 = vmatpush1.msra.mxu0 0.0
    %330 = vmatprep.subr.mxu0 0.0
    %331 = vmatpush1.msra.mxu0 0.0
    %332 = vmatprep.subr.mxu0 0.0
    %333 = vmatpush1.msra.mxu0 0.0
    %334 = vmatprep.subr.mxu0 0.0
    %335 = vmatpush1.msra.mxu0 0.0
    %336 = vmatprep.mubr.f32.mxu0 0.0
    %337 = vmatmul.mubr.f32.gmra.mrb[0].mxu0 %v57
    %v338 = vpop.f32.mrb[0].mxu0
    %v339 = vadd.f32 0.0, %v338
    %v340 = vpop.f32.mrb[0].mxu0
    %v341 = vadd.f32 0.0, %v340
    %342 = vdwg.mxu0
    %343 = vmatprep.subr.mxu0 %v48
    %344 = vmatpush1.msra.mxu0 %v47
    %345 = vmatprep.subr.mxu0 0.0
    %346 = vmatpush1.msra.mxu0 0.0
    %347 = vmatprep.subr.mxu0 0.0
    %348 = vmatpush1.msra.mxu0 0.0
    %349 = vmatprep.subr.mxu0 0.0
    %350 = vmatpush1.msra.mxu0 0.0
    %351 = vmatprep.subr.mxu0 0.0
    %352 = vmatpush1.msra.mxu0 0.0
    %353 = vmatprep.subr.mxu0 0.0
    %354 = vmatpush1.msra.mxu0 0.0
    %355 = vmatprep.subr.mxu0 0.0
    %356 = vmatpush1.msra.mxu0 0.0
    %357 = vmatprep.subr.mxu0 0.0
    %358 = vmatpush1.msra.mxu0 0.0
    %359 = vmatprep.subr.mxu0 0.0
    %360 = vmatpush1.msra.mxu0 0.0
    %361 = vmatprep.subr.mxu0 0.0
    %362 = vmatpush1.msra.mxu0 0.0
    %363 = vmatprep.subr.mxu0 0.0
    %364 = vmatpush1.msra.mxu0 0.0
    %365 = vmatprep.subr.mxu0 0.0
    %366 = vmatpush1.msra.mxu0 0.0
    %367 = vmatprep.subr.mxu0 0.0
    %368 = vmatpush1.msra.mxu0 0.0
    %369 = vmatprep.subr.mxu0 0.0
    %370 = vmatpush1.msra.mxu0 0.0
    %371 = vmatprep.subr.mxu0 0.0
    %372 = vmatpush1.msra.mxu0 0.0
    %373 = vmatprep.subr.mxu0 0.0
    %374 = vmatpush1.msra.mxu0 0.0
    %375 = vmatprep.subr.mxu0 0.0
    %376 = vmatpush1.msra.mxu0 0.0
    %377 = vmatprep.subr.mxu0 0.0
    %378 = vmatpush1.msra.mxu0 0.0
    %379 = vmatprep.subr.mxu0 0.0
    %380 = vmatpush1.msra.mxu0 0.0
    %381 = vmatprep.subr.mxu0 0.0
    %382 = vmatpush1.msra.mxu0 0.0
    %383 = vmatprep.subr.mxu0 0.0
    %384 = vmatpush1.msra.mxu0 0.0
    %385 = vmatprep.subr.mxu0 0.0
    %386 = vmatpush1.msra.mxu0 0.0
    %387 = vmatprep.subr.mxu0 0.0
    %388 = vmatpush1.msra.mxu0 0.0
    %389 = vmatprep.subr.mxu0 0.0
    %390 = vmatpush1.msra.mxu0 0.0
    %391 = vmatprep.subr.mxu0 0.0
    %392 = vmatpush1.msra.mxu0 0.0
    %393 = vmatprep.subr.mxu0 0.0
    %394 = vmatpush1.msra.mxu0 0.0
    %395 = vmatprep.subr.mxu0 0.0
    %396 = vmatpush1.msra.mxu0 0.0
    %397 = vmatprep.subr.mxu0 0.0
    %398 = vmatpush1.msra.mxu0 0.0
    %399 = vmatprep.subr.mxu0 0.0
    %400 = vmatpush1.msra.mxu0 0.0
    %401 = vmatprep.subr.mxu0 0.0
    %402 = vmatpush1.msra.mxu0 0.0
    %403 = vmatprep.subr.mxu0 0.0
    %404 = vmatpush1.msra.mxu0 0.0
    %405 = vmatprep.subr.mxu0 0.0
    %406 = vmatpush1.msra.mxu0 0.0
    %407 = vmatprep.mubr.f32.mxu0 0.0
    %408 = vmatmul.mubr.f32.gmra.mrb[0].mxu0 %v57
    %v409 = vpop.f32.mrb[0].mxu0
    %v410 = vadd.f32 0.0, %v409
    %v411 = vpop.f32.mrb[0].mxu0
    %v412 = vadd.f32 0.0, %v411
    %413 = vdwg.mxu0
    %414 = vmatprep.subr.mxu0 %v50
    %415 = vmatpush1.msra.mxu0 %v49
    %416 = vmatprep.subr.mxu0 0.0
    %417 = vmatpush1.msra.mxu0 0.0
    %418 = vmatprep.subr.mxu0 0.0
    %419 = vmatpush1.msra.mxu0 0.0
    %420 = vmatprep.subr.mxu0 0.0
    %421 = vmatpush1.msra.mxu0 0.0
    %422 = vmatprep.subr.mxu0 0.0
    %423 = vmatpush1.msra.mxu0 0.0
    %424 = vmatprep.subr.mxu0 0.0
    %425 = vmatpush1.msra.mxu0 0.0
    %426 = vmatprep.subr.mxu0 0.0
    %427 = vmatpush1.msra.mxu0 0.0
    %428 = vmatprep.subr.mxu0 0.0
    %429 = vmatpush1.msra.mxu0 0.0
    %430 = vmatprep.subr.mxu0 0.0
    %431 = vmatpush1.msra.mxu0 0.0
    %432 = vmatprep.subr.mxu0 0.0
    %433 = vmatpush1.msra.mxu0 0.0
    %434 = vmatprep.subr.mxu0 0.0
    %435 = vmatpush1.msra.mxu0 0.0
    %436 = vmatprep.subr.mxu0 0.0
    %437 = vmatpush1.msra.mxu0 0.0
    %438 = vmatprep.subr.mxu0 0.0
    %439 = vmatpush1.msra.mxu0 0.0
    %440 = vmatprep.subr.mxu0 0.0
    %441 = vmatpush1.msra.mxu0 0.0
    %442 = vmatprep.subr.mxu0 0.0
    %443 = vmatpush1.msra.mxu0 0.0
    %444 = vmatprep.subr.mxu0 0.0
    %445 = vmatpush1.msra.mxu0 0.0
    %446 = vmatprep.subr.mxu0 0.0
    %447 = vmatpush1.msra.mxu0 0.0
    %448 = vmatprep.subr.mxu0 0.0
    %449 = vmatpush1.msra.mxu0 0.0
    %450 = vmatprep.subr.mxu0 0.0
    %451 = vmatpush1.msra.mxu0 0.0
    %452 = vmatprep.subr.mxu0 0.0
    %453 = vmatpush1.msra.mxu0 0.0
    %454 = vmatprep.subr.mxu0 0.0
    %455 = vmatpush1.msra.mxu0 0.0
    %456 = vmatprep.subr.mxu0 0.0
    %457 = vmatpush1.msra.mxu0 0.0
    %458 = vmatprep.subr.mxu0 0.0
    %459 = vmatpush1.msra.mxu0 0.0
    %460 = vmatprep.subr.mxu0 0.0
    %461 = vmatpush1.msra.mxu0 0.0
    %462 = vmatprep.subr.mxu0 0.0
    %463 = vmatpush1.msra.mxu0 0.0
    %464 = vmatprep.subr.mxu0 0.0
    %465 = vmatpush1.msra.mxu0 0.0
    %466 = vmatprep.subr.mxu0 0.0
    %467 = vmatpush1.msra.mxu0 0.0
    %468 = vmatprep.subr.mxu0 0.0
    %469 = vmatpush1.msra.mxu0 0.0
    %470 = vmatprep.subr.mxu0 0.0
    %471 = vmatpush1.msra.mxu0 0.0
    %472 = vmatprep.subr.mxu0 0.0
    %473 = vmatpush1.msra.mxu0 0.0
    %474 = vmatprep.subr.mxu0 0.0
    %475 = vmatpush1.msra.mxu0 0.0
    %476 = vmatprep.subr.mxu0 0.0
    %477 = vmatpush1.msra.mxu0 0.0
    %478 = vmatprep.mubr.f32.mxu0 0.0
    %479 = vmatmul.mubr.f32.gmra.mrb[0].mxu0 %v57
    %v480 = vpop.f32.mrb[0].mxu0
    %v481 = vadd.f32 0.0, %v480
    %v482 = vpop.f32.mrb[0].mxu0
    %v483 = vadd.f32 0.0, %v482
    %484 = vdwg.mxu0
    %485 = vmatprep.subr.mxu0 %v52
    %486 = vmatpush1.msra.mxu0 %v51
    %487 = vmatprep.subr.mxu0 0.0
    %488 = vmatpush1.msra.mxu0 0.0
    %489 = vmatprep.subr.mxu0 0.0
    %490 = vmatpush1.msra.mxu0 0.0
    %491 = vmatprep.subr.mxu0 0.0
    %492 = vmatpush1.msra.mxu0 0.0
    %493 = vmatprep.subr.mxu0 0.0
    %494 = vmatpush1.msra.mxu0 0.0
    %495 = vmatprep.subr.mxu0 0.0
    %496 = vmatpush1.msra.mxu0 0.0
    %497 = vmatprep.subr.mxu0 0.0
    %498 = vmatpush1.msra.mxu0 0.0
    %499 = vmatprep.subr.mxu0 0.0
    %500 = vmatpush1.msra.mxu0 0.0
    %501 = vmatprep.subr.mxu0 0.0
    %502 = vmatpush1.msra.mxu0 0.0
    %503 = vmatprep.subr.mxu0 0.0
    %504 = vmatpush1.msra.mxu0 0.0
    %505 = vmatprep.subr.mxu0 0.0
    %506 = vmatpush1.msra.mxu0 0.0
    %507 = vmatprep.subr.mxu0 0.0
    %508 = vmatpush1.msra.mxu0 0.0
    %509 = vmatprep.subr.mxu0 0.0
    %510 = vmatpush1.msra.mxu0 0.0
    %511 = vmatprep.subr.mxu0 0.0
    %512 = vmatpush1.msra.mxu0 0.0
    %513 = vmatprep.subr.mxu0 0.0
    %514 = vmatpush1.msra.mxu0 0.0
    %515 = vmatprep.subr.mxu0 0.0
    %516 = vmatpush1.msra.mxu0 0.0
    %517 = vmatprep.subr.mxu0 0.0
    %518 = vmatpush1.msra.mxu0 0.0
    %519 = vmatprep.subr.mxu0 0.0
    %520 = vmatpush1.msra.mxu0 0.0
    %521 = vmatprep.subr.mxu0 0.0
    %522 = vmatpush1.msra.mxu0 0.0
    %523 = vmatprep.subr.mxu0 0.0
    %524 = vmatpush1.msra.mxu0 0.0
    %525 = vmatprep.subr.mxu0 0.0
    %526 = vmatpush1.msra.mxu0 0.0
    %527 = vmatprep.subr.mxu0 0.0
    %528 = vmatpush1.msra.mxu0 0.0
    %529 = vmatprep.subr.mxu0 0.0
    %530 = vmatpush1.msra.mxu0 0.0
    %531 = vmatprep.subr.mxu0 0.0
    %532 = vmatpush1.msra.mxu0 0.0
    %533 = vmatprep.subr.mxu0 0.0
    %534 = vmatpush1.msra.mxu0 0.0
    %535 = vmatprep.subr.mxu0 0.0
    %536 = vmatpush1.msra.mxu0 0.0
    %537 = vmatprep.subr.mxu0 0.0
    %538 = vmatpush1.msra.mxu0 0.0
    %539 = vmatprep.subr.mxu0 0.0
    %540 = vmatpush1.msra.mxu0 0.0
    %541 = vmatprep.subr.mxu0 0.0
    %542 = vmatpush1.msra.mxu0 0.0
    %543 = vmatprep.subr.mxu0 0.0
    %544 = vmatpush1.msra.mxu0 0.0
    %545 = vmatprep.subr.mxu0 0.0
    %546 = vmatpush1.msra.mxu0 0.0
    %547 = vmatprep.subr.mxu0 0.0
    %548 = vmatpush1.msra.mxu0 0.0
    %549 = vmatprep.mubr.f32.mxu0 0.0
    %550 = vmatmul.mubr.f32.gmra.mrb[0].mxu0 %v57
    %v551 = vpop.f32.mrb[0].mxu0
    %v552 = vadd.f32 0.0, %v551
    %v553 = vpop.f32.mrb[0].mxu0
    %v554 = vadd.f32 0.0, %v553
    %555 = vdwg.mxu0
    %556 = vmatprep.subr.mxu0 %v54
    %557 = vmatpush1.msra.mxu0 %v53
    %558 = vmatprep.subr.mxu0 0.0
    %559 = vmatpush1.msra.mxu0 0.0
    %560 = vmatprep.subr.mxu0 0.0
    %561 = vmatpush1.msra.mxu0 0.0
    %562 = vmatprep.subr.mxu0 0.0
    %563 = vmatpush1.msra.mxu0 0.0
    %564 = vmatprep.subr.mxu0 0.0
    %565 = vmatpush1.msra.mxu0 0.0
    %566 = vmatprep.subr.mxu0 0.0
    %567 = vmatpush1.msra.mxu0 0.0
    %568 = vmatprep.subr.mxu0 0.0
    %569 = vmatpush1.msra.mxu0 0.0
    %570 = vmatprep.subr.mxu0 0.0
    %571 = vmatpush1.msra.mxu0 0.0
    %572 = vmatprep.subr.mxu0 0.0
    %573 = vmatpush1.msra.mxu0 0.0
    %574 = vmatprep.subr.mxu0 0.0
    %575 = vmatpush1.msra.mxu0 0.0
    %576 = vmatprep.subr.mxu0 0.0
    %577 = vmatpush1.msra.mxu0 0.0
    %578 = vmatprep.subr.mxu0 0.0
    %579 = vmatpush1.msra.mxu0 0.0
    %580 = vmatprep.subr.mxu0 0.0
    %581 = vmatpush1.msra.mxu0 0.0
    %582 = vmatprep.subr.mxu0 0.0
    %583 = vmatpush1.msra.mxu0 0.0
    %584 = vmatprep.subr.mxu0 0.0
    %585 = vmatpush1.msra.mxu0 0.0
    %586 = vmatprep.subr.mxu0 0.0
    %587 = vmatpush1.msra.mxu0 0.0
    %588 = vmatprep.subr.mxu0 0.0
    %589 = vmatpush1.msra.mxu0 0.0
    %590 = vmatprep.subr.mxu0 0.0
    %591 = vmatpush1.msra.mxu0 0.0
    %592 = vmatprep.subr.mxu0 0.0
    %593 = vmatpush1.msra.mxu0 0.0
    %594 = vmatprep.subr.mxu0 0.0
    %595 = vmatpush1.msra.mxu0 0.0
    %596 = vmatprep.subr.mxu0 0.0
    %597 = vmatpush1.msra.mxu0 0.0
    %598 = vmatprep.subr.mxu0 0.0
    %599 = vmatpush1.msra.mxu0 0.0
    %600 = vmatprep.subr.mxu0 0.0
    %601 = vmatpush1.msra.mxu0 0.0
    %602 = vmatprep.subr.mxu0 0.0
    %603 = vmatpush1.msra.mxu0 0.0
    %604 = vmatprep.subr.mxu0 0.0
    %605 = vmatpush1.msra.mxu0 0.0
    %606 = vmatprep.subr.mxu0 0.0
    %607 = vmatpush1.msra.mxu0 0.0
    %608 = vmatprep.subr.mxu0 0.0
    %609 = vmatpush1.msra.mxu0 0.0
    %610 = vmatprep.subr.mxu0 0.0
    %611 = vmatpush1.msra.mxu0 0.0
    %612 = vmatprep.subr.mxu0 0.0
    %613 = vmatpush1.msra.mxu0 0.0
    %614 = vmatprep.subr.mxu0 0.0
    %615 = vmatpush1.msra.mxu0 0.0
    %616 = vmatprep.subr.mxu0 0.0
    %617 = vmatpush1.msra.mxu0 0.0
    %618 = vmatprep.subr.mxu0 0.0
    %619 = vmatpush1.msra.mxu0 0.0
    %620 = vmatprep.mubr.f32.mxu0 0.0
    %621 = vmatmul.mubr.f32.gmra.mrb[0].mxu0 %v57
    %v622 = vpop.f32.mrb[0].mxu0
    %v623 = vadd.f32 0.0, %v622
    %v624 = vpop.f32.mrb[0].mxu0
    %v625 = vadd.f32 0.0, %v624
    %626 = vdwg.mxu0
    %627 = vst [vmem:[#allocation7] sm:$0xff] %v126
    %628 = vst [vmem:[#allocation7 + $0x8] sm:$0xff] %v128
    %629 = vst [vmem:[#allocation7 + $0x10] sm:$0xff] %v197
    %630 = vst [vmem:[#allocation7 + $0x18] sm:$0xff] %v199
    %631 = vst [vmem:[#allocation7 + $0x20] sm:$0xff] %v268
    %632 = vst [vmem:[#allocation7 + $0x28] sm:$0xff] %v270
    %633 = vst [vmem:[#allocation7 + $0x30] sm:$0xff] %v339
    %634 = vst [vmem:[#allocation7 + $0x38] sm:$0xff] %v341
    %635 = vst [vmem:[#allocation7 + $0x40] sm:$0xff] %v410
    %636 = vst [vmem:[#allocation7 + $0x48] sm:$0xff] %v412
    %637 = vst [vmem:[#allocation7 + $0x50] sm:$0xff] %v481
    %638 = vst [vmem:[#allocation7 + $0x58] sm:$0xff] %v483
    %639 = vst [vmem:[#allocation7 + $0x60] sm:$0xff] %v552
    %640 = vst [vmem:[#allocation7 + $0x68] sm:$0xff] %v554
    %641 = vst [vmem:[#allocation7 + $0x70] sm:$0xff] %v623
    %642 = vst [vmem:[#allocation7 + $0x78] sm:$0xff] %v625
    %s643 = scalar_lea.vmem [#allocation2], 128
    %v644 = vld [vmem:[%s643] sm:$0xff]
    %v645 = vld [vmem:[%s643 + $0x8] sm:$0xff]
    %v646 = vld [vmem:[%s643 + $0x10] sm:$0xff]
    %v647 = vld [vmem:[%s643 + $0x18] sm:$0xff]
    %v648 = vld [vmem:[%s643 + $0x20] sm:$0xff]
    %v649 = vld [vmem:[%s643 + $0x28] sm:$0xff]
    %v650 = vld [vmem:[%s643 + $0x30] sm:$0xff]
    %v651 = vld [vmem:[%s643 + $0x38] sm:$0xff]
    %v652 = vld [vmem:[%s643 + $0x40] sm:$0xff]
    %v653 = vld [vmem:[%s643 + $0x48] sm:$0xff]
    %v654 = vld [vmem:[%s643 + $0x50] sm:$0xff]
    %v655 = vld [vmem:[%s643 + $0x58] sm:$0xff]
    %v656 = vld [vmem:[%s643 + $0x60] sm:$0xff]
    %v657 = vld [vmem:[%s643 + $0x68] sm:$0xff]
    %v658 = vld [vmem:[%s643 + $0x70] sm:$0xff]
    %v659 = vld [vmem:[%s643 + $0x78] sm:$0xff]
    %660 = vmatprep.subr.mxu0 %v645
    %661 = vmatpush1.msra.mxu0 %v644
    %662 = vmatprep.subr.mxu0 0.0
    %663 = vmatpush1.msra.mxu0 0.0
    %664 = vmatprep.subr.mxu0 0.0
    %665 = vmatpush1.msra.mxu0 0.0
    %666 = vmatprep.subr.mxu0 0.0
    %667 = vmatpush1.msra.mxu0 0.0
    %668 = vmatprep.subr.mxu0 0.0
    %669 = vmatpush1.msra.mxu0 0.0
    %670 = vmatprep.subr.mxu0 0.0
    %671 = vmatpush1.msra.mxu0 0.0
    %672 = vmatprep.subr.mxu0 0.0
    %673 = vmatpush1.msra.mxu0 0.0
    %674 = vmatprep.subr.mxu0 0.0
    %675 = vmatpush1.msra.mxu0 0.0
    %676 = vmatprep.subr.mxu0 0.0
    %677 = vmatpush1.msra.mxu0 0.0
    %678 = vmatprep.subr.mxu0 0.0
    %679 = vmatpush1.msra.mxu0 0.0
    %680 = vmatprep.subr.mxu0 0.0
    %681 = vmatpush1.msra.mxu0 0.0
    %682 = vmatprep.subr.mxu0 0.0
    %683 = vmatpush1.msra.mxu0 0.0
    %684 = vmatprep.subr.mxu0 0.0
    %685 = vmatpush1.msra.mxu0 0.0
    %686 = vmatprep.subr.mxu0 0.0
    %687 = vmatpush1.msra.mxu0 0.0
    %688 = vmatprep.subr.mxu0 0.0
    %689 = vmatpush1.msra.mxu0 0.0
    %690 = vmatprep.subr.mxu0 0.0
    %691 = vmatpush1.msra.mxu0 0.0
    %692 = vmatprep.subr.mxu0 0.0
    %693 = vmatpush1.msra.mxu0 0.0
    %694 = vmatprep.subr.mxu0 0.0
    %695 = vmatpush1.msra.mxu0 0.0
    %696 = vmatprep.subr.mxu0 0.0
    %697 = vmatpush1.msra.mxu0 0.0
    %698 = vmatprep.subr.mxu0 0.0
    %699 = vmatpush1.msra.mxu0 0.0
    %700 = vmatprep.subr.mxu0 0.0
    %701 = vmatpush1.msra.mxu0 0.0
    %702 = vmatprep.subr.mxu0 0.0
    %703 = vmatpush1.msra.mxu0 0.0
    %704 = vmatprep.subr.mxu0 0.0
    %705 = vmatpush1.msra.mxu0 0.0
    %706 = vmatprep.subr.mxu0 0.0
    %707 = vmatpush1.msra.mxu0 0.0
    %708 = vmatprep.subr.mxu0 0.0
    %709 = vmatpush1.msra.mxu0 0.0
    %710 = vmatprep.subr.mxu0 0.0
    %711 = vmatpush1.msra.mxu0 0.0
    %712 = vmatprep.subr.mxu0 0.0
    %713 = vmatpush1.msra.mxu0 0.0
    %714 = vmatprep.subr.mxu0 0.0
    %715 = vmatpush1.msra.mxu0 0.0
    %716 = vmatprep.subr.mxu0 0.0
    %717 = vmatpush1.msra.mxu0 0.0
    %718 = vmatprep.subr.mxu0 0.0
    %719 = vmatpush1.msra.mxu0 0.0
    %720 = vmatprep.subr.mxu0 0.0
    %721 = vmatpush1.msra.mxu0 0.0
    %722 = vmatprep.subr.mxu0 0.0
    %723 = vmatpush1.msra.mxu0 0.0
    %724 = vmatprep.mubr.f32.mxu0 0.0
    %725 = vmatmul.mubr.f32.gmra.mrb[0].mxu0 %v57
    %v726 = vpop.f32.mrb[0].mxu0
    %v727 = vadd.f32 0.0, %v726
    %v728 = vpop.f32.mrb[0].mxu0
    %v729 = vadd.f32 0.0, %v728
    %730 = vdwg.mxu0
    %731 = vmatprep.subr.mxu0 %v647
    %732 = vmatpush1.msra.mxu0 %v646
    %733 = vmatprep.subr.mxu0 0.0
    %734 = vmatpush1.msra.mxu0 0.0
    %735 = vmatprep.subr.mxu0 0.0
    %736 = vmatpush1.msra.mxu0 0.0
    %737 = vmatprep.subr.mxu0 0.0
    %738 = vmatpush1.msra.mxu0 0.0
    %739 = vmatprep.subr.mxu0 0.0
    %740 = vmatpush1.msra.mxu0 0.0
    %741 = vmatprep.subr.mxu0 0.0
    %742 = vmatpush1.msra.mxu0 0.0
    %743 = vmatprep.subr.mxu0 0.0
    %744 = vmatpush1.msra.mxu0 0.0
    %745 = vmatprep.subr.mxu0 0.0
    %746 = vmatpush1.msra.mxu0 0.0
    %747 = vmatprep.subr.mxu0 0.0
    %748 = vmatpush1.msra.mxu0 0.0
    %749 = vmatprep.subr.mxu0 0.0
    %750 = vmatpush1.msra.mxu0 0.0
    %751 = vmatprep.subr.mxu0 0.0
    %752 = vmatpush1.msra.mxu0 0.0
    %753 = vmatprep.subr.mxu0 0.0
    %754 = vmatpush1.msra.mxu0 0.0
    %755 = vmatprep.subr.mxu0 0.0
    %756 = vmatpush1.msra.mxu0 0.0
    %757 = vmatprep.subr.mxu0 0.0
    %758 = vmatpush1.msra.mxu0 0.0
    %759 = vmatprep.subr.mxu0 0.0
    %760 = vmatpush1.msra.mxu0 0.0
    %761 = vmatprep.subr.mxu0 0.0
    %762 = vmatpush1.msra.mxu0 0.0
    %763 = vmatprep.subr.mxu0 0.0
    %764 = vmatpush1.msra.mxu0 0.0
    %765 = vmatprep.subr.mxu0 0.0
    %766 = vmatpush1.msra.mxu0 0.0
    %767 = vmatprep.subr.mxu0 0.0
    %768 = vmatpush1.msra.mxu0 0.0
    %769 = vmatprep.subr.mxu0 0.0
    %770 = vmatpush1.msra.mxu0 0.0
    %771 = vmatprep.subr.mxu0 0.0
    %772 = vmatpush1.msra.mxu0 0.0
    %773 = vmatprep.subr.mxu0 0.0
    %774 = vmatpush1.msra.mxu0 0.0
    %775 = vmatprep.subr.mxu0 0.0
    %776 = vmatpush1.msra.mxu0 0.0
    %777 = vmatprep.subr.mxu0 0.0
    %778 = vmatpush1.msra.mxu0 0.0
    %779 = vmatprep.subr.mxu0 0.0
    %780 = vmatpush1.msra.mxu0 0.0
    %781 = vmatprep.subr.mxu0 0.0
    %782 = vmatpush1.msra.mxu0 0.0
    %783 = vmatprep.subr.mxu0 0.0
    %784 = vmatpush1.msra.mxu0 0.0
    %785 = vmatprep.subr.mxu0 0.0
    %786 = vmatpush1.msra.mxu0 0.0
    %787 = vmatprep.subr.mxu0 0.0
    %788 = vmatpush1.msra.mxu0 0.0
    %789 = vmatprep.subr.mxu0 0.0
    %790 = vmatpush1.msra.mxu0 0.0
    %791 = vmatprep.subr.mxu0 0.0
    %792 = vmatpush1.msra.mxu0 0.0
    %793 = vmatprep.subr.mxu0 0.0
    %794 = vmatpush1.msra.mxu0 0.0
    %795 = vmatprep.mubr.f32.mxu0 0.0
    %796 = vmatmul.mubr.f32.gmra.mrb[0].mxu0 %v57
    %v797 = vpop.f32.mrb[0].mxu0
    %v798 = vadd.f32 0.0, %v797
    %v799 = vpop.f32.mrb[0].mxu0
    %v800 = vadd.f32 0.0, %v799
    %801 = vdwg.mxu0
    %802 = vmatprep.subr.mxu0 %v649
    %803 = vmatpush1.msra.mxu0 %v648
    %804 = vmatprep.subr.mxu0 0.0
    %805 = vmatpush1.msra.mxu0 0.0
    %806 = vmatprep.subr.mxu0 0.0
    %807 = vmatpush1.msra.mxu0 0.0
    %808 = vmatprep.subr.mxu0 0.0
    %809 = vmatpush1.msra.mxu0 0.0
    %810 = vmatprep.subr.mxu0 0.0
    %811 = vmatpush1.msra.mxu0 0.0
    %812 = vmatprep.subr.mxu0 0.0
    %813 = vmatpush1.msra.mxu0 0.0
    %814 = vmatprep.subr.mxu0 0.0
    %815 = vmatpush1.msra.mxu0 0.0
    %816 = vmatprep.subr.mxu0 0.0
    %817 = vmatpush1.msra.mxu0 0.0
    %818 = vmatprep.subr.mxu0 0.0
    %819 = vmatpush1.msra.mxu0 0.0
    %820 = vmatprep.subr.mxu0 0.0
    %821 = vmatpush1.msra.mxu0 0.0
    %822 = vmatprep.subr.mxu0 0.0
    %823 = vmatpush1.msra.mxu0 0.0
    %824 = vmatprep.subr.mxu0 0.0
    %825 = vmatpush1.msra.mxu0 0.0
    %826 = vmatprep.subr.mxu0 0.0
    %827 = vmatpush1.msra.mxu0 0.0
    %828 = vmatprep.subr.mxu0 0.0
    %829 = vmatpush1.msra.mxu0 0.0
    %830 = vmatprep.subr.mxu0 0.0
    %831 = vmatpush1.msra.mxu0 0.0
    %832 = vmatprep.subr.mxu0 0.0
    %833 = vmatpush1.msra.mxu0 0.0
    %834 = vmatprep.subr.mxu0 0.0
    %835 = vmatpush1.msra.mxu0 0.0
    %836 = vmatprep.subr.mxu0 0.0
    %837 = vmatpush1.msra.mxu0 0.0
    %838 = vmatprep.subr.mxu0 0.0
    %839 = vmatpush1.msra.mxu0 0.0
    %840 = vmatprep.subr.mxu0 0.0
    %841 = vmatpush1.msra.mxu0 0.0
    %842 = vmatprep.subr.mxu0 0.0
    %843 = vmatpush1.msra.mxu0 0.0
    %844 = vmatprep.subr.mxu0 0.0
    %845 = vmatpush1.msra.mxu0 0.0
    %846 = vmatprep.subr.mxu0 0.0
    %847 = vmatpush1.msra.mxu0 0.0
    %848 = vmatprep.subr.mxu0 0.0
    %849 = vmatpush1.msra.mxu0 0.0
    %850 = vmatprep.subr.mxu0 0.0
    %851 = vmatpush1.msra.mxu0 0.0
    %852 = vmatprep.subr.mxu0 0.0
    %853 = vmatpush1.msra.mxu0 0.0
    %854 = vmatprep.subr.mxu0 0.0
    %855 = vmatpush1.msra.mxu0 0.0
    %856 = vmatprep.subr.mxu0 0.0
    %857 = vmatpush1.msra.mxu0 0.0
    %858 = vmatprep.subr.mxu0 0.0
    %859 = vmatpush1.msra.mxu0 0.0
    %860 = vmatprep.subr.mxu0 0.0
    %861 = vmatpush1.msra.mxu0 0.0
    %862 = vmatprep.subr.mxu0 0.0
    %863 = vmatpush1.msra.mxu0 0.0
    %864 = vmatprep.subr.mxu0 0.0
    %865 = vmatpush1.msra.mxu0 0.0
    %866 = vmatprep.mubr.f32.mxu0 0.0
    %867 = vmatmul.mubr.f32.gmra.mrb[0].mxu0 %v57
    %v868 = vpop.f32.mrb[0].mxu0
    %v869 = vadd.f32 0.0, %v868
    %v870 = vpop.f32.mrb[0].mxu0
    %v871 = vadd.f32 0.0, %v870
    %872 = vdwg.mxu0
    %873 = vmatprep.subr.mxu0 %v651
    %874 = vmatpush1.msra.mxu0 %v650
    %875 = vmatprep.subr.mxu0 0.0
    %876 = vmatpush1.msra.mxu0 0.0
    %877 = vmatprep.subr.mxu0 0.0
    %878 = vmatpush1.msra.mxu0 0.0
    %879 = vmatprep.subr.mxu0 0.0
    %880 = vmatpush1.msra.mxu0 0.0
    %881 = vmatprep.subr.mxu0 0.0
    %882 = vmatpush1.msra.mxu0 0.0
    %883 = vmatprep.subr.mxu0 0.0
    %884 = vmatpush1.msra.mxu0 0.0
    %885 = vmatprep.subr.mxu0 0.0
    %886 = vmatpush1.msra.mxu0 0.0
    %887 = vmatprep.subr.mxu0 0.0
    %888 = vmatpush1.msra.mxu0 0.0
    %889 = vmatprep.subr.mxu0 0.0
    %890 = vmatpush1.msra.mxu0 0.0
    %891 = vmatprep.subr.mxu0 0.0
    %892 = vmatpush1.msra.mxu0 0.0
    %893 = vmatprep.subr.mxu0 0.0
    %894 = vmatpush1.msra.mxu0 0.0
    %895 = vmatprep.subr.mxu0 0.0
    %896 = vmatpush1.msra.mxu0 0.0
    %897 = vmatprep.subr.mxu0 0.0
    %898 = vmatpush1.msra.mxu0 0.0
    %899 = vmatprep.subr.mxu0 0.0
    %900 = vmatpush1.msra.mxu0 0.0
    %901 = vmatprep.subr.mxu0 0.0
    %902 = vmatpush1.msra.mxu0 0.0
    %903 = vmatprep.subr.mxu0 0.0
    %904 = vmatpush1.msra.mxu0 0.0
    %905 = vmatprep.subr.mxu0 0.0
    %906 = vmatpush1.msra.mxu0 0.0
    %907 = vmatprep.subr.mxu0 0.0
    %908 = vmatpush1.msra.mxu0 0.0
    %909 = vmatprep.subr.mxu0 0.0
    %910 = vmatpush1.msra.mxu0 0.0
    %911 = vmatprep.subr.mxu0 0.0
    %912 = vmatpush1.msra.mxu0 0.0
    %913 = vmatprep.subr.mxu0 0.0
    %914 = vmatpush1.msra.mxu0 0.0
    %915 = vmatprep.subr.mxu0 0.0
    %916 = vmatpush1.msra.mxu0 0.0
    %917 = vmatprep.subr.mxu0 0.0
    %918 = vmatpush1.msra.mxu0 0.0
    %919 = vmatprep.subr.mxu0 0.0
    %920 = vmatpush1.msra.mxu0 0.0
    %921 = vmatprep.subr.mxu0 0.0
    %922 = vmatpush1.msra.mxu0 0.0
    %923 = vmatprep.subr.mxu0 0.0
    %924 = vmatpush1.msra.mxu0 0.0
    %925 = vmatprep.subr.mxu0 0.0
    %926 = vmatpush1.msra.mxu0 0.0
    %927 = vmatprep.subr.mxu0 0.0
    %928 = vmatpush1.msra.mxu0 0.0
    %929 = vmatprep.subr.mxu0 0.0
    %930 = vmatpush1.msra.mxu0 0.0
    %931 = vmatprep.subr.mxu0 0.0
    %932 = vmatpush1.msra.mxu0 0.0
    %933 = vmatprep.subr.mxu0 0.0
    %934 = vmatpush1.msra.mxu0 0.0
    %935 = vmatprep.subr.mxu0 0.0
    %936 = vmatpush1.msra.mxu0 0.0
    %937 = vmatprep.mubr.f32.mxu0 0.0
    %938 = vmatmul.mubr.f32.gmra.mrb[0].mxu0 %v57
    %v939 = vpop.f32.mrb[0].mxu0
    %v940 = vadd.f32 0.0, %v939
    %v941 = vpop.f32.mrb[0].mxu0
    %v942 = vadd.f32 0.0, %v941
    %943 = vdwg.mxu0
    %944 = vmatprep.subr.mxu0 %v653
    %945 = vmatpush1.msra.mxu0 %v652
    %946 = vmatprep.subr.mxu0 0.0
    %947 = vmatpush1.msra.mxu0 0.0
    %948 = vmatprep.subr.mxu0 0.0
    %949 = vmatpush1.msra.mxu0 0.0
    %950 = vmatprep.subr.mxu0 0.0
    %951 = vmatpush1.msra.mxu0 0.0
    %952 = vmatprep.subr.mxu0 0.0
    %953 = vmatpush1.msra.mxu0 0.0
    %954 = vmatprep.subr.mxu0 0.0
    %955 = vmatpush1.msra.mxu0 0.0
    %956 = vmatprep.subr.mxu0 0.0
    %957 = vmatpush1.msra.mxu0 0.0
    %958 = vmatprep.subr.mxu0 0.0
    %959 = vmatpush1.msra.mxu0 0.0
    %960 = vmatprep.subr.mxu0 0.0
    %961 = vmatpush1.msra.mxu0 0.0
    %962 = vmatprep.subr.mxu0 0.0
    %963 = vmatpush1.msra.mxu0 0.0
    %964 = vmatprep.subr.mxu0 0.0
    %965 = vmatpush1.msra.mxu0 0.0
    %966 = vmatprep.subr.mxu0 0.0
    %967 = vmatpush1.msra.mxu0 0.0
    %968 = vmatprep.subr.mxu0 0.0
    %969 = vmatpush1.msra.mxu0 0.0
    %970 = vmatprep.subr.mxu0 0.0
    %971 = vmatpush1.msra.mxu0 0.0
    %972 = vmatprep.subr.mxu0 0.0
    %973 = vmatpush1.msra.mxu0 0.0
    %974 = vmatprep.subr.mxu0 0.0
    %975 = vmatpush1.msra.mxu0 0.0
    %976 = vmatprep.subr.mxu0 0.0
    %977 = vmatpush1.msra.mxu0 0.0
    %978 = vmatprep.subr.mxu0 0.0
    %979 = vmatpush1.msra.mxu0 0.0
    %980 = vmatprep.subr.mxu0 0.0
    %981 = vmatpush1.msra.mxu0 0.0
    %982 = vmatprep.subr.mxu0 0.0
    %983 = vmatpush1.msra.mxu0 0.0
    %984 = vmatprep.subr.mxu0 0.0
    %985 = vmatpush1.msra.mxu0 0.0
    %986 = vmatprep.subr.mxu0 0.0
    %987 = vmatpush1.msra.mxu0 0.0
    %988 = vmatprep.subr.mxu0 0.0
    %989 = vmatpush1.msra.mxu0 0.0
    %990 = vmatprep.subr.mxu0 0.0
    %991 = vmatpush1.msra.mxu0 0.0
    %992 = vmatprep.subr.mxu0 0.0
    %993 = vmatpush1.msra.mxu0 0.0
    %994 = vmatprep.subr.mxu0 0.0
    %995 = vmatpush1.msra.mxu0 0.0
    %996 = vmatprep.subr.mxu0 0.0
    %997 = vmatpush1.msra.mxu0 0.0
    %998 = vmatprep.subr.mxu0 0.0
    %999 = vmatpush1.msra.mxu0 0.0
    %1000 = vmatprep.subr.mxu0 0.0
    %1001 = vmatpush1.msra.mxu0 0.0
    %1002 = vmatprep.subr.mxu0 0.0
    %1003 = vmatpush1.msra.mxu0 0.0
    %1004 = vmatprep.subr.mxu0 0.0
    %1005 = vmatpush1.msra.mxu0 0.0
    %1006 = vmatprep.subr.mxu0 0.0
    %1007 = vmatpush1.msra.mxu0 0.0
    %1008 = vmatprep.mubr.f32.mxu0 0.0
    %1009 = vmatmul.mubr.f32.gmra.mrb[0].mxu0 %v57
    %v1010 = vpop.f32.mrb[0].mxu0
    %v1011 = vadd.f32 0.0, %v1010
    %v1012 = vpop.f32.mrb[0].mxu0
    %v1013 = vadd.f32 0.0, %v1012
    %1014 = vdwg.mxu0
    %1015 = vmatprep.subr.mxu0 %v655
    %1016 = vmatpush1.msra.mxu0 %v654
    %1017 = vmatprep.subr.mxu0 0.0
    %1018 = vmatpush1.msra.mxu0 0.0
    %1019 = vmatprep.subr.mxu0 0.0
    %1020 = vmatpush1.msra.mxu0 0.0
    %1021 = vmatprep.subr.mxu0 0.0
    %1022 = vmatpush1.msra.mxu0 0.0
    %1023 = vmatprep.subr.mxu0 0.0
    %1024 = vmatpush1.msra.mxu0 0.0
    %1025 = vmatprep.subr.mxu0 0.0
    %1026 = vmatpush1.msra.mxu0 0.0
    %1027 = vmatprep.subr.mxu0 0.0
    %1028 = vmatpush1.msra.mxu0 0.0
    %1029 = vmatprep.subr.mxu0 0.0
    %1030 = vmatpush1.msra.mxu0 0.0
    %1031 = vmatprep.subr.mxu0 0.0
    %1032 = vmatpush1.msra.mxu0 0.0
    %1033 = vmatprep.subr.mxu0 0.0
    %1034 = vmatpush1.msra.mxu0 0.0
    %1035 = vmatprep.subr.mxu0 0.0
    %1036 = vmatpush1.msra.mxu0 0.0
    %1037 = vmatprep.subr.mxu0 0.0
    %1038 = vmatpush1.msra.mxu0 0.0
    %1039 = vmatprep.subr.mxu0 0.0
    %1040 = vmatpush1.msra.mxu0 0.0
    %1041 = vmatprep.subr.mxu0 0.0
    %1042 = vmatpush1.msra.mxu0 0.0
    %1043 = vmatprep.subr.mxu0 0.0
    %1044 = vmatpush1.msra.mxu0 0.0
    %1045 = vmatprep.subr.mxu0 0.0
    %1046 = vmatpush1.msra.mxu0 0.0
    %1047 = vmatprep.subr.mxu0 0.0
    %1048 = vmatpush1.msra.mxu0 0.0
    %1049 = vmatprep.subr.mxu0 0.0
    %1050 = vmatpush1.msra.mxu0 0.0
    %1051 = vmatprep.subr.mxu0 0.0
    %1052 = vmatpush1.msra.mxu0 0.0
    %1053 = vmatprep.subr.mxu0 0.0
    %1054 = vmatpush1.msra.mxu0 0.0
    %1055 = vmatprep.subr.mxu0 0.0
    %1056 = vmatpush1.msra.mxu0 0.0
    %1057 = vmatprep.subr.mxu0 0.0
    %1058 = vmatpush1.msra.mxu0 0.0
    %1059 = vmatprep.subr.mxu0 0.0
    %1060 = vmatpush1.msra.mxu0 0.0
    %1061 = vmatprep.subr.mxu0 0.0
    %1062 = vmatpush1.msra.mxu0 0.0
    %1063 = vmatprep.subr.mxu0 0.0
    %1064 = vmatpush1.msra.mxu0 0.0
    %1065 = vmatprep.subr.mxu0 0.0
    %1066 = vmatpush1.msra.mxu0 0.0
    %1067 = vmatprep.subr.mxu0 0.0
    %1068 = vmatpush1.msra.mxu0 0.0
    %1069 = vmatprep.subr.mxu0 0.0
    %1070 = vmatpush1.msra.mxu0 0.0
    %1071 = vmatprep.subr.mxu0 0.0
    %1072 = vmatpush1.msra.mxu0 0.0
    %1073 = vmatprep.subr.mxu0 0.0
    %1074 = vmatpush1.msra.mxu0 0.0
    %1075 = vmatprep.subr.mxu0 0.0
    %1076 = vmatpush1.msra.mxu0 0.0
    %1077 = vmatprep.subr.mxu0 0.0
    %1078 = vmatpush1.msra.mxu0 0.0
    %1079 = vmatprep.mubr.f32.mxu0 0.0
    %1080 = vmatmul.mubr.f32.gmra.mrb[0].mxu0 %v57
    %v1081 = vpop.f32.mrb[0].mxu0
    %v1082 = vadd.f32 0.0, %v1081
    %v1083 = vpop.f32.mrb[0].mxu0
    %v1084 = vadd.f32 0.0, %v1083
    %1085 = vdwg.mxu0
    %1086 = vmatprep.subr.mxu0 %v657
    %1087 = vmatpush1.msra.mxu0 %v656
    %1088 = vmatprep.subr.mxu0 0.0
    %1089 = vmatpush1.msra.mxu0 0.0
    %1090 = vmatprep.subr.mxu0 0.0
    %1091 = vmatpush1.msra.mxu0 0.0
    %1092 = vmatprep.subr.mxu0 0.0
    %1093 = vmatpush1.msra.mxu0 0.0
    %1094 = vmatprep.subr.mxu0 0.0
    %1095 = vmatpush1.msra.mxu0 0.0
    %1096 = vmatprep.subr.mxu0 0.0
    %1097 = vmatpush1.msra.mxu0 0.0
    %1098 = vmatprep.subr.mxu0 0.0
    %1099 = vmatpush1.msra.mxu0 0.0
    %1100 = vmatprep.subr.mxu0 0.0
    %1101 = vmatpush1.msra.mxu0 0.0
    %1102 = vmatprep.subr.mxu0 0.0
    %1103 = vmatpush1.msra.mxu0 0.0
    %1104 = vmatprep.subr.mxu0 0.0
    %1105 = vmatpush1.msra.mxu0 0.0
    %1106 = vmatprep.subr.mxu0 0.0
    %1107 = vmatpush1.msra.mxu0 0.0
    %1108 = vmatprep.subr.mxu0 0.0
    %1109 = vmatpush1.msra.mxu0 0.0
    %1110 = vmatprep.subr.mxu0 0.0
    %1111 = vmatpush1.msra.mxu0 0.0
    %1112 = vmatprep.subr.mxu0 0.0
    %1113 = vmatpush1.msra.mxu0 0.0
    %1114 = vmatprep.subr.mxu0 0.0
    %1115 = vmatpush1.msra.mxu0 0.0
    %1116 = vmatprep.subr.mxu0 0.0
    %1117 = vmatpush1.msra.mxu0 0.0
    %1118 = vmatprep.subr.mxu0 0.0
    %1119 = vmatpush1.msra.mxu0 0.0
    %1120 = vmatprep.subr.mxu0 0.0
    %1121 = vmatpush1.msra.mxu0 0.0
    %1122 = vmatprep.subr.mxu0 0.0
    %1123 = vmatpush1.msra.mxu0 0.0
    %1124 = vmatprep.subr.mxu0 0.0
    %1125 = vmatpush1.msra.mxu0 0.0
    %1126 = vmatprep.subr.mxu0 0.0
    %1127 = vmatpush1.msra.mxu0 0.0
    %1128 = vmatprep.subr.mxu0 0.0
    %1129 = vmatpush1.msra.mxu0 0.0
    %1130 = vmatprep.subr.mxu0 0.0
    %1131 = vmatpush1.msra.mxu0 0.0
    %1132 = vmatprep.subr.mxu0 0.0
    %1133 = vmatpush1.msra.mxu0 0.0
    %1134 = vmatprep.subr.mxu0 0.0
    %1135 = vmatpush1.msra.mxu0 0.0
    %1136 = vmatprep.subr.mxu0 0.0
    %1137 = vmatpush1.msra.mxu0 0.0
    %1138 = vmatprep.subr.mxu0 0.0
    %1139 = vmatpush1.msra.mxu0 0.0
    %1140 = vmatprep.subr.mxu0 0.0
    %1141 = vmatpush1.msra.mxu0 0.0
    %1142 = vmatprep.subr.mxu0 0.0
    %1143 = vmatpush1.msra.mxu0 0.0
    %1144 = vmatprep.subr.mxu0 0.0
    %1145 = vmatpush1.msra.mxu0 0.0
    %1146 = vmatprep.subr.mxu0 0.0
    %1147 = vmatpush1.msra.mxu0 0.0
    %1148 = vmatprep.subr.mxu0 0.0
    %1149 = vmatpush1.msra.mxu0 0.0
    %1150 = vmatprep.mubr.f32.mxu0 0.0
    %1151 = vmatmul.mubr.f32.gmra.mrb[0].mxu0 %v57
    %v1152 = vpop.f32.mrb[0].mxu0
    %v1153 = vadd.f32 0.0, %v1152
    %v1154 = vpop.f32.mrb[0].mxu0
    %v1155 = vadd.f32 0.0, %v1154
    %1156 = vdwg.mxu0
    %1157 = vmatprep.subr.mxu0 %v659
    %1158 = vmatpush1.msra.mxu0 %v658
    %1159 = vmatprep.subr.mxu0 0.0
    %1160 = vmatpush1.msra.mxu0 0.0
    %1161 = vmatprep.subr.mxu0 0.0
    %1162 = vmatpush1.msra.mxu0 0.0
    %1163 = vmatprep.subr.mxu0 0.0
    %1164 = vmatpush1.msra.mxu0 0.0
    %1165 = vmatprep.subr.mxu0 0.0
    %1166 = vmatpush1.msra.mxu0 0.0
    %1167 = vmatprep.subr.mxu0 0.0
    %1168 = vmatpush1.msra.mxu0 0.0
    %1169 = vmatprep.subr.mxu0 0.0
    %1170 = vmatpush1.msra.mxu0 0.0
    %1171 = vmatprep.subr.mxu0 0.0
    %1172 = vmatpush1.msra.mxu0 0.0
    %1173 = vmatprep.subr.mxu0 0.0
    %1174 = vmatpush1.msra.mxu0 0.0
    %1175 = vmatprep.subr.mxu0 0.0
    %1176 = vmatpush1.msra.mxu0 0.0
    %1177 = vmatprep.subr.mxu0 0.0
    %1178 = vmatpush1.msra.mxu0 0.0
    %1179 = vmatprep.subr.mxu0 0.0
    %1180 = vmatpush1.msra.mxu0 0.0
    %1181 = vmatprep.subr.mxu0 0.0
    %1182 = vmatpush1.msra.mxu0 0.0
    %1183 = vmatprep.subr.mxu0 0.0
    %1184 = vmatpush1.msra.mxu0 0.0
    %1185 = vmatprep.subr.mxu0 0.0
    %1186 = vmatpush1.msra.mxu0 0.0
    %1187 = vmatprep.subr.mxu0 0.0
    %1188 = vmatpush1.msra.mxu0 0.0
    %1189 = vmatprep.subr.mxu0 0.0
    %1190 = vmatpush1.msra.mxu0 0.0
    %1191 = vmatprep.subr.mxu0 0.0
    %1192 = vmatpush1.msra.mxu0 0.0
    %1193 = vmatprep.subr.mxu0 0.0
    %1194 = vmatpush1.msra.mxu0 0.0
    %1195 = vmatprep.subr.mxu0 0.0
    %1196 = vmatpush1.msra.mxu0 0.0
    %1197 = vmatprep.subr.mxu0 0.0
    %1198 = vmatpush1.msra.mxu0 0.0
    %1199 = vmatprep.subr.mxu0 0.0
    %1200 = vmatpush1.msra.mxu0 0.0
    %1201 = vmatprep.subr.mxu0 0.0
    %1202 = vmatpush1.msra.mxu0 0.0
    %1203 = vmatprep.subr.mxu0 0.0
    %1204 = vmatpush1.msra.mxu0 0.0
    %1205 = vmatprep.subr.mxu0 0.0
    %1206 = vmatpush1.msra.mxu0 0.0
    %1207 = vmatprep.subr.mxu0 0.0
    %1208 = vmatpush1.msra.mxu0 0.0
    %1209 = vmatprep.subr.mxu0 0.0
    %1210 = vmatpush1.msra.mxu0 0.0
    %1211 = vmatprep.subr.mxu0 0.0
    %1212 = vmatpush1.msra.mxu0 0.0
    %1213 = vmatprep.subr.mxu0 0.0
    %1214 = vmatpush1.msra.mxu0 0.0
    %1215 = vmatprep.subr.mxu0 0.0
    %1216 = vmatpush1.msra.mxu0 0.0
    %1217 = vmatprep.subr.mxu0 0.0
    %1218 = vmatpush1.msra.mxu0 0.0
    %1219 = vmatprep.subr.mxu0 0.0
    %1220 = vmatpush1.msra.mxu0 0.0
    %1221 = vmatprep.mubr.f32.mxu0 0.0
    %1222 = vmatmul.mubr.f32.gmra.mrb[0].mxu0 %v57
    %v1223 = vpop.f32.mrb[0].mxu0
    %v1224 = vadd.f32 0.0, %v1223
    %v1225 = vpop.f32.mrb[0].mxu0
    %v1226 = vadd.f32 0.0, %v1225
    %1227 = vdwg.mxu0
    %s1228 = scalar_lea.vmem [#allocation7], 128
    %1229 = vst [vmem:[%s1228] sm:$0xff] %v727
    %1230 = vst [vmem:[%s1228 + $0x8] sm:$0xff] %v729
    %1231 = vst [vmem:[%s1228 + $0x10] sm:$0xff] %v798
    %1232 = vst [vmem:[%s1228 + $0x18] sm:$0xff] %v800
    %1233 = vst [vmem:[%s1228 + $0x20] sm:$0xff] %v869
    %1234 = vst [vmem:[%s1228 + $0x28] sm:$0xff] %v871
    %1235 = vst [vmem:[%s1228 + $0x30] sm:$0xff] %v940
    %1236 = vst [vmem:[%s1228 + $0x38] sm:$0xff] %v942
    %1237 = vst [vmem:[%s1228 + $0x40] sm:$0xff] %v1011
    %1238 = vst [vmem:[%s1228 + $0x48] sm:$0xff] %v1013
    %1239 = vst [vmem:[%s1228 + $0x50] sm:$0xff] %v1082
    %1240 = vst [vmem:[%s1228 + $0x58] sm:$0xff] %v1084
    %1241 = vst [vmem:[%s1228 + $0x60] sm:$0xff] %v1153
    %1242 = vst [vmem:[%s1228 + $0x68] sm:$0xff] %v1155
    %1243 = vst [vmem:[%s1228 + $0x70] sm:$0xff] %v1224
    %1244 = vst [vmem:[%s1228 + $0x78] sm:$0xff] %v1226
    // Predicated region
    $region18: #{tpu_custom_call.1} parent=1 // pred_check
      _
    $region19: #{tpu_custom_call.1} parent=1 // pred_check_branch
      %1246 = sbr.rel (0) target = $region21
    $region20: #{tpu_custom_call.1} parent=1 // pred_region
      %s1248 = ssub.s32 4096, 4096
      %1249 = vsyncadd [#allocation4], %s1248
      %s1250 = sshll.u32 [#allocation7], 4
      %s1251 = int_to_ptr.vmem [resolvable:$true] %s1250
      %1256 = dma.vmem_to_hbm [thread:$0]  %s1251, 4096, %s2, [#allocation4], 2048, 2048, 128
    $region21: #{tpu_custom_call.1} parent=1 // pred_fallthru
      _
    // Predicated region
    $region22: #{tpu_custom_call.1} parent=1 // pred_check
      _
    $region23: #{tpu_custom_call.1} parent=1 // pred_check_branch
      %1258 = sbr.rel (0) target = $region25
    $region24: #{tpu_custom_call.1} parent=1 // pred_region
      %1259 = dma.done [#allocation4], 4096
    $region25: #{tpu_custom_call.1} parent=1 // pred_fallthru
      _
    %1260 = vsyncpa [#allocation3], 1
    %1261 = vsyncpa [#allocation6], 1
    %1262 = vsyncpa [#allocation4], 1

</llo_original>
